<compile_context>
chip_gen: v7x
topology: tpu7x:2x2x1
jax: 0.10.0
libtpu: 0.0.40
codegen_flags: <defaults>
</compile_context>

<pallas_src>
import jax
import jax.numpy as jnp
from jax.experimental import pallas as pl
from jax.experimental.pallas import tpu as pltpu

INPUT_SIZE = 32
HIDDEN = 64
NUM_CLASSES = 9
BN_EPS = 1e-5
HPAD = 128            # lane-dense padded feature width for every hidden / output tensor
STAT_ROWS = 8         # sublane-aligned rows per partial-stats block
VMEM_CAP = 40 << 20   # <= ~40 MiB keeps headroom on v7x's 64 MiB VMEM


def _round_up(n, m):
    return ((n + m - 1) // m) * m


# ---------------------------------------------------------------------------
# per-tile math shared by the kernels (padded, lane-dense arrays)
# ---------------------------------------------------------------------------

def _linear(h, w, b, cdt):
    # MXU matmul; bf16 operands on the perf path, always f32 accumulation.
    return jnp.dot(h.astype(cdt), w, preferred_element_type=jnp.float32) + b


# ---------------------------------------------------------------------------
# kernel 1..3: per-layer BatchNorm statistics (masked sum, sum-of-squares)
# ---------------------------------------------------------------------------

def _make_stats_kernel(stage, batch, tile_b, tiles_per_chunk, cdt):
    """Accumulate sum / sumsq of BN-`stage`'s pre-activation for one batch chunk."""

    def kernel(*refs):
        x_ref = refs[0]
        s_ref = refs[-1]                 # (STAT_ROWS, 2*HPAD) per-chunk partial
        c = pl.program_id(0)             # chunk (v7x: one per TensorCore)
        i = pl.program_id(1)             # batch tile inside the chunk

        @pl.when(i == 0)
        def _init():
            s_ref[...] = jnp.zeros_like(s_ref)

        x = x_ref[...]
        w1, b1 = refs[1], refs[2]
        z = jnp.maximum(_linear(x, w1[...], b1[...], cdt), 0.0)          # BN1 pre-act
        if stage >= 2:
            sc1, sh1, wf2, bf2 = refs[3], refs[4], refs[5], refs[6]
            h1 = z * sc1[...] + sh1[...]                                  # BN1 as FMA
            za2 = _linear(h1, wf2[...], bf2[...], cdt)                    # block2 | skip2
            z = jnp.maximum(za2[:, :HPAD], 0.0)                           # BN2 pre-act
        if stage >= 3:
            sc2, sh2, wf3, bf3 = refs[7], refs[8], refs[9], refs[10]
            h2 = z * sc2[...] + sh2[...] + za2[:, HPAD:]
            za3 = _linear(h2, wf3[...], bf3[...], cdt)                    # block3 | skip3
            z = jnp.maximum(za3[:, :HPAD], 0.0)                           # BN3 pre-act

        # mask padded batch rows out of the statistics
        row0 = (c * tiles_per_chunk + i) * tile_b
        row = row0 + jax.lax.broadcasted_iota(jnp.int32, (tile_b, 1), 0)
        zm = z * (row < batch).astype(jnp.float32)
        s_ref[0:1, :HPAD] += jnp.sum(zm, axis=0, keepdims=True)
        s_ref[0:1, HPAD:] += jnp.sum(zm * zm, axis=0, keepdims=True)

    return kernel


# ---------------------------------------------------------------------------
# kernel 4: full forward per batch tile using precomputed BN scale / shift
# ---------------------------------------------------------------------------

def _make_apply_kernel(cdt, approx_sigmoid):

    def kernel(x_ref, w1, b1, sc1, sh1, wf2, bf2, sc2, sh2, wf3, bf3,
               sc3, sh3, w4, b4, out_ref):
        x = x_ref[...]

        h1 = jnp.maximum(_linear(x, w1[...], b1[...], cdt), 0.0) * sc1[...] + sh1[...]

        za2 = _linear(h1, wf2[...], bf2[...], cdt)                        # block2 | skip2
        h2 = jnp.maximum(za2[:, :HPAD], 0.0) * sc2[...] + sh2[...] + za2[:, HPAD:]

        za3 = _linear(h2, wf3[...], bf3[...], cdt)                        # block3 | skip3
        h3 = jnp.maximum(za3[:, :HPAD], 0.0) * sc3[...] + sh3[...] + za3[:, HPAD:]

        # sigmoid = 1/(1+e^-x): exp on the EUP, reciprocal off the VPU
        # (approx only on the bf16 perf path; exact divide on the f32 path).
        sig = pl.reciprocal(1.0 + jnp.exp(-h3), approx=approx_sigmoid)
        out = _linear(sig, w4[...], b4[...], cdt)
        out_ref[...] = out.astype(out_ref.dtype)     # lane-dense (tb, 128) store

    return kernel


# ---------------------------------------------------------------------------
# parameters
# ---------------------------------------------------------------------------

def init_params(key):
    """Deterministic parameter init matching _initialize_weights()."""
    h2 = HIDDEN // 2
    ks = jax.random.split(key, 6)

    def lin(k, fan_in, fan_out):
        # PyTorch stores W as (out, in); we keep the transposed (in, out) layout.
        w = jax.random.normal(k, (fan_in, fan_out), dtype=jnp.float32)
        b = jnp.zeros((1, fan_out), dtype=jnp.float32)
        return w, b

    def bn(feat):
        return (jnp.ones((1, feat), jnp.float32), jnp.zeros((1, feat), jnp.float32))

    params = {}
    params["w1"], params["b1"] = lin(ks[0], INPUT_SIZE, HIDDEN)
    params["g1"], params["be1"] = bn(HIDDEN)
    params["ws2"], params["bs2"] = lin(ks[1], HIDDEN, h2)
    params["w2"], params["b2"] = lin(ks[2], HIDDEN, h2)
    params["g2"], params["be2"] = bn(h2)
    params["ws3"], params["bs3"] = lin(ks[3], h2, h2)
    params["w3"], params["b3"] = lin(ks[4], h2, h2)
    params["g3"], params["be3"] = bn(h2)
    params["w4"], params["b4"] = lin(ks[5], h2, NUM_CLASSES)
    return params


def _pack_params(params, cdt):
    """Pad features to 128 lanes and fuse block+skip weights per residual stage."""

    def pad2(a, rows, cols):
        out = jnp.zeros((rows, cols), jnp.float32)
        return out.at[: a.shape[0], : a.shape[1]].set(a.astype(jnp.float32))

    pk = {}
    pk["w1"] = pad2(params["w1"], INPUT_SIZE, HPAD).astype(cdt)
    pk["b1"] = pad2(params["b1"], 1, HPAD)
    pk["g1"] = pad2(params["g1"], 1, HPAD)           # padded gamma/beta are 0
    pk["be1"] = pad2(params["be1"], 1, HPAD)

    pk["wf2"] = jnp.concatenate(
        [pad2(params["w2"], HPAD, HPAD), pad2(params["ws2"], HPAD, HPAD)], axis=1
    ).astype(cdt)                                     # (128, 256): block | skip
    pk["bf2"] = jnp.concatenate(
        [pad2(params["b2"], 1, HPAD), pad2(params["bs2"], 1, HPAD)], axis=1)
    pk["g2"] = pad2(params["g2"], 1, HPAD)
    pk["be2"] = pad2(params["be2"], 1, HPAD)

    pk["wf3"] = jnp.concatenate(
        [pad2(params["w3"], HPAD, HPAD), pad2(params["ws3"], HPAD, HPAD)], axis=1
    ).astype(cdt)
    pk["bf3"] = jnp.concatenate(
        [pad2(params["b3"], 1, HPAD), pad2(params["bs3"], 1, HPAD)], axis=1)
    pk["g3"] = pad2(params["g3"], 1, HPAD)
    pk["be3"] = pad2(params["be3"], 1, HPAD)

    pk["w4"] = pad2(params["w4"], HPAD, HPAD).astype(cdt)   # 9 -> 128 lane-dense out
    pk["b4"] = pad2(params["b4"], 1, HPAD)
    return pk


def _bn_scale_shift(partial, gamma, beta, batch):
    """Reduce per-chunk partial [sum | sumsq] and fold BN into scale / shift."""
    s = jnp.sum(partial, axis=0, keepdims=True)          # (1, 2*HPAD)
    inv_n = 1.0 / batch
    mean = s[:, :HPAD] * inv_n
    var = jnp.maximum(s[:, HPAD:] * inv_n - mean * mean, 0.0)
    scale = gamma * jax.lax.rsqrt(var + BN_EPS)           # padded lanes -> 0
    shift = beta - mean * scale
    return scale, shift


# ---------------------------------------------------------------------------
# wrapper
# ---------------------------------------------------------------------------

def heavy_pose_classifier(x, params, *, tile_b=2048, use_bf16_matmul=True):
    """Forward pass (training-mode BatchNorm, dropout p=0)."""
    b = x.shape[0]
    x2d = x.reshape(b, -1)
    assert x2d.shape[1] == INPUT_SIZE

    # bf16 MXU operands are the default performance path (bf16-native MXU on
    # v5e/v6e/v7x, halves the x / output HBM streams swept 4x).  BN, sigmoid
    # and matmul accumulation stay f32 regardless of cdt.
    cdt = jnp.bfloat16 if use_bf16_matmul else jnp.float32
    x2d = x2d.astype(cdt)

    pk = _pack_params(params, cdt)
    param_bytes = sum(int(a.size) * a.dtype.itemsize for a in pk.values())

    # batch tiling: 16-sublane aligned tiles, clamped to the v7x-safe VMEM cap
    tb = min(_round_up(max(int(tile_b), 16), 16), _round_up(b, 16))
    def _vmem_est(t):
        return 2 * param_bytes + 24 * t * HPAD * 4 + (4 << 20)
    while _vmem_est(tb) > VMEM_CAP and tb > 16:
        tb = max(16, _round_up(tb // 2, 16))
    vmem_limit = min(_vmem_est(tb), VMEM_CAP)

    b_pad = _round_up(b, tb)
    n_tiles = b_pad // tb
    # two chunks -> the stats sweep also uses both v7x TensorCores
    # (on v5e/v6e the chunk axis simply iterates; same total work)
    nchunk = 2 if (n_tiles >= 2 and n_tiles % 2 == 0) else 1
    tpc = n_tiles // nchunk
    if b_pad != b:
        x2d = jnp.pad(x2d, ((0, b_pad - b), (0, 0)))

    stats_cparams = pltpu.CompilerParams(
        dimension_semantics=("parallel", "arbitrary"),
        vmem_limit_bytes=vmem_limit)
    x_spec_stats = pl.BlockSpec((tb, INPUT_SIZE), lambda c, i: (c * tpc + i, 0))
    full_spec = lambda a: pl.BlockSpec(a.shape, lambda c, i: (0, 0))
    stats_out_spec = pl.BlockSpec((STAT_ROWS, 2 * HPAD), lambda c, i: (c, 0))
    stats_shape = jax.ShapeDtypeStruct((nchunk * STAT_ROWS, 2 * HPAD), jnp.float32)

    def stats_call(stage, args):
        return pl.pallas_call(
            _make_stats_kernel(stage, b, tb, tpc, cdt),
            grid=(nchunk, tpc),
            out_shape=stats_shape,
            in_specs=[x_spec_stats] + [full_spec(a) for a in args],
            out_specs=stats_out_spec,
            compiler_params=stats_cparams,
        )(x2d, *args)

    # --- BN statistics: one call per BN layer; per-chunk partials reduced  ---
    # --- here and folded into per-layer scale/shift (single FMA in kernels) --
    s1p = stats_call(1, [pk["w1"], pk["b1"]])
    sc1, sh1 = _bn_scale_shift(s1p, pk["g1"], pk["be1"], b)

    s2p = stats_call(2, [pk["w1"], pk["b1"], sc1, sh1, pk["wf2"], pk["bf2"]])
    sc2, sh2 = _bn_scale_shift(s2p, pk["g2"], pk["be2"], b)

    s3p = stats_call(3, [pk["w1"], pk["b1"], sc1, sh1, pk["wf2"], pk["bf2"],
                         sc2, sh2, pk["wf3"], pk["bf3"]])
    sc3, sh3 = _bn_scale_shift(s3p, pk["g3"], pk["be3"], b)

    # --- full forward per batch tile ("parallel" -> megacore on v7x) ---
    w_apply = [pk["w1"], pk["b1"], sc1, sh1, pk["wf2"], pk["bf2"], sc2, sh2,
               pk["wf3"], pk["bf3"], sc3, sh3, pk["w4"], pk["b4"]]
    out = pl.pallas_call(
        _make_apply_kernel(cdt, approx_sigmoid=use_bf16_matmul),
        grid=(n_tiles,),
        # bf16 lane-dense output on the perf path cuts the dominant writeback
        # stream ~2x while keeping unmasked 128-lane stores.
        out_shape=jax.ShapeDtypeStruct((b_pad, HPAD), cdt),
        in_specs=[pl.BlockSpec((tb, INPUT_SIZE), lambda i: (i, 0))]
        + [pl.BlockSpec(a.shape, lambda i: (0, 0)) for a in w_apply],
        out_specs=pl.BlockSpec((tb, HPAD), lambda i: (i, 0)),
        compiler_params=pltpu.CompilerParams(
            dimension_semantics=("parallel",),
            vmem_limit_bytes=vmem_limit),
    )(x2d, *w_apply)

    return out[:b, :NUM_CLASSES].astype(jnp.float32)


# ---------------------------------------------------------------------------
# pure-JAX reference
# ---------------------------------------------------------------------------

def _reference(x, params, compute_dtype=jnp.float32):
    x = x.reshape(x.shape[0], -1).astype(jnp.float32)

    def lin(h, w, b):
        return jnp.dot(h.astype(compute_dtype), w.astype(compute_dtype),
                       preferred_element_type=jnp.float32) + b

    def bn(h, g, be):
        m = jnp.mean(h, axis=0, keepdims=True)
        v = jnp.mean((h - m) ** 2, axis=0, keepdims=True)
        return (h - m) / jnp.sqrt(v + BN_EPS) * g + be

    h1 = bn(jnp.maximum(lin(x, params["w1"], params["b1"]), 0.0),
            params["g1"], params["be1"])
    h2 = bn(jnp.maximum(lin(h1, params["w2"], params["b2"]), 0.0),
            params["g2"], params["be2"]) + lin(h1, params["ws2"], params["bs2"])
    h3 = bn(jnp.maximum(lin(h2, params["w3"], params["b3"]), 0.0),
            params["g3"], params["be3"]) + lin(h2, params["ws3"], params["bs3"])
    return lin(jax.nn.sigmoid(h3), params["w4"], params["b4"])


if __name__ == "__main__":
    key = jax.random.PRNGKey(0)
    k_x, k_p = jax.random.split(key)

    # Small input consistent with input_size=32: (batch=2, 4, 8) flattens to (2, 32).
    x = jax.random.normal(k_x, (2, 4, 8), dtype=jnp.float32)
    params = init_params(k_p)

    # exact f32 path: parity check against the pure-JAX reference.
    out = jax.block_until_ready(
        heavy_pose_classifier(x, params, use_bf16_matmul=False))
    ref = _reference(x, params)
    assert out.shape == (2, NUM_CLASSES)
    assert jnp.allclose(out, ref, atol=5e-4, rtol=5e-4)

    # default perf path (bf16 MXU operands, bf16 lane-dense output): sanity check.
    out_bf = jax.block_until_ready(heavy_pose_classifier(x, params))
    ref_bf = _reference(x, params, compute_dtype=jnp.bfloat16)
    assert out_bf.shape == (2, NUM_CLASSES)
    assert bool(jnp.all(jnp.isfinite(out_bf)))
    assert float(jnp.max(jnp.abs(out_bf - ref_bf))) < 0.5

    print("KERNEL_OK")
</pallas_src>

<mosaic_0001>
module attributes {stable_mosaic.version = 11 : i64} {
  func.func @kernel(%arg0: i32, %arg1: i32, %arg2: memref<16x32xf32, #tpu.memory_space<vmem>>, %arg3: memref<32x128xf32, #tpu.memory_space<vmem>>, %arg4: memref<1x128xf32, #tpu.memory_space<vmem>>, %arg5: memref<8x256xf32, #tpu.memory_space<vmem>>) attributes {dimension_semantics = [#tpu.dimension_semantics<parallel>, #tpu.dimension_semantics<arbitrary>], iteration_bounds = array<i64: 1, 1>, scalar_prefetch = 0 : i64, scratch_operands = 0 : i64, tpu.core_type = #tpu.core_type<tc>, window_params = [{transform_indices = @transform_0, window_bounds = array<i64: 16, 32>}, {pipeline_mode = #tpu.pipeline_mode<synchronous>, transform_indices = @transform_1, window_bounds = array<i64: 32, 128>}, {pipeline_mode = #tpu.pipeline_mode<synchronous>, transform_indices = @transform_2, window_bounds = array<i64: 1, 128>}, {transform_indices = @transform_3, window_bounds = array<i64: 8, 256>}]} {
    %c0_i32 = arith.constant 0 : i32
    %0 = arith.cmpi eq, %arg1, %c0_i32 : i32
    %1 = arith.extui %0 : i1 to i32
    %c0_i32_0 = arith.constant 0 : i32
    %2 = arith.cmpi ne, %1, %c0_i32_0 : i32
    scf.if %2 {
      %cst_16 = arith.constant 0.000000e+00 : f32
      %34 = vector.broadcast %cst_16 : f32 to vector<8x256xf32>
      %c0_17 = arith.constant 0 : index
      %c0_18 = arith.constant 0 : index
      %35 = vector.load %arg5[%c0_17, %c0_18] : memref<8x256xf32, #tpu.memory_space<vmem>>, vector<8x256xf32>
      tpu.vector_store %arg5[%c0_17, %c0_18], %34 {strides = array<i32>} : memref<8x256xf32, #tpu.memory_space<vmem>>, vector<8x256xf32>,
    } else {
    }
    %c0 = arith.constant 0 : index
    %c0_1 = arith.constant 0 : index
    %3 = vector.load %arg2[%c0, %c0_1] : memref<16x32xf32, #tpu.memory_space<vmem>>, vector<16x32xf32>
    %c0_2 = arith.constant 0 : index
    %c0_3 = arith.constant 0 : index
    %4 = vector.load %arg3[%c0_2, %c0_3] : memref<32x128xf32, #tpu.memory_space<vmem>>, vector<32x128xf32>
    %c0_4 = arith.constant 0 : index
    %c0_5 = arith.constant 0 : index
    %5 = vector.load %arg4[%c0_4, %c0_5] : memref<1x128xf32, #tpu.memory_space<vmem>>, vector<1x128xf32>
    %cst = arith.constant dense<0.000000e+00> : vector<16x128xf32>
    %6 = tpu.matmul %3, %4, %cst {dimension_numbers = #tpu.dot_dimension_numbers<[1], [0], [0], [1], [0, 0, 1, 1], [], []>} : vector<16x32xf32>, vector<32x128xf32>, vector<16x128xf32> -> vector<16x128xf32>
    %7 = vector.broadcast %5 : vector<1x128xf32> to vector<16x128xf32>
    %8 = arith.addf %6, %7 : vector<16x128xf32>
    %cst_6 = arith.constant 0.000000e+00 : f32
    %9 = vector.broadcast %cst_6 : f32 to vector<16x128xf32>
    %10 = arith.maximumf %8, %9 : vector<16x128xf32>
    %c1_i32 = arith.constant 1 : i32
    %11 = arith.muli %arg0, %c1_i32 : i32
    %12 = arith.addi %11, %arg1 : i32
    %c16_i32 = arith.constant 16 : i32
    %13 = arith.muli %12, %c16_i32 : i32
    %14 = tpu.iota {dimensions = array<i32: 0>} : vector<16x1xi32>
    %15 = vector.broadcast %13 : i32 to vector<16x1xi32>
    %16 = arith.addi %15, %14 : vector<16x1xi32>
    %c2_i32 = arith.constant 2 : i32
    %17 = vector.broadcast %c2_i32 : i32 to vector<16x1xi32>
    %18 = arith.cmpi slt, %16, %17 : vector<16x1xi32>
    %19 = arith.extui %18 : vector<16x1xi1> to vector<16x1xi32>
    %20 = arith.sitofp %19 : vector<16x1xi32> to vector<16x1xf32>
    %21 = vector.broadcast %20 : vector<16x1xf32> to vector<16x128xf32>
    %22 = arith.mulf %10, %21 : vector<16x128xf32>
    %c0_7 = arith.constant 0 : index
    %c0_8 = arith.constant 0 : index
    %23 = vector.load %arg5[%c0_7, %c0_8] : memref<8x256xf32, #tpu.memory_space<vmem>>, vector<1x128xf32>
    %cst_9 = arith.constant dense<0.000000e+00> : vector<128xf32>
    %24 = vector.multi_reduction <add>, %22, %cst_9 [0] : vector<16x128xf32> to vector<128xf32>
    %25 = vector.shape_cast %24 : vector<128xf32> to vector<1x128xf32>
    %26 = arith.addf %23, %25 : vector<1x128xf32>
    %c0_10 = arith.constant 0 : index
    %c0_11 = arith.constant 0 : index
    %27 = vector.load %arg5[%c0_10, %c0_11] : memref<8x256xf32, #tpu.memory_space<vmem>>, vector<1x128xf32>
    tpu.vector_store %arg5[%c0_10, %c0_11], %26 {strides = array<i32>} : memref<8x256xf32, #tpu.memory_space<vmem>>, vector<1x128xf32>,
    %c0_12 = arith.constant 0 : index
    %c128 = arith.constant 128 : index
    %28 = vector.load %arg5[%c0_12, %c128] : memref<8x256xf32, #tpu.memory_space<vmem>>, vector<1x128xf32>
    %29 = arith.mulf %22, %22 : vector<16x128xf32>
    %cst_13 = arith.constant dense<0.000000e+00> : vector<128xf32>
    %30 = vector.multi_reduction <add>, %29, %cst_13 [0] : vector<16x128xf32> to vector<128xf32>
    %31 = vector.shape_cast %30 : vector<128xf32> to vector<1x128xf32>
    %32 = arith.addf %28, %31 : vector<1x128xf32>
    %c0_14 = arith.constant 0 : index
    %c128_15 = arith.constant 128 : index
    %33 = vector.load %arg5[%c0_14, %c128_15] : memref<8x256xf32, #tpu.memory_space<vmem>>, vector<1x128xf32>
    tpu.vector_store %arg5[%c0_14, %c128_15], %32 {strides = array<i32>} : memref<8x256xf32, #tpu.memory_space<vmem>>, vector<1x128xf32>,
    return
  }
  func.func @transform_0(%arg0: i32, %arg1: i32) -> (i32, i32) {
    %c1_i32 = arith.constant 1 : i32
    %0 = arith.muli %arg0, %c1_i32 : i32
    %1 = arith.addi %0, %arg1 : i32
    %c0_i32 = arith.constant 0 : i32
    %c0_i32_0 = arith.constant 0 : i32
    return %1, %c0_i32 : i32, i32
  }
  func.func @transform_1(%arg0: i32, %arg1: i32) -> (i32, i32) {
    %c0_i32 = arith.constant 0 : i32
    %c0_i32_0 = arith.constant 0 : i32
    %c0_i32_1 = arith.constant 0 : i32
    return %c0_i32, %c0_i32_0 : i32, i32
  }
  func.func @transform_2(%arg0: i32, %arg1: i32) -> (i32, i32) {
    %c0_i32 = arith.constant 0 : i32
    %c0_i32_0 = arith.constant 0 : i32
    %c0_i32_1 = arith.constant 0 : i32
    return %c0_i32, %c0_i32_0 : i32, i32
  }
  func.func @transform_3(%arg0: i32, %arg1: i32) -> (i32, i32) {
    %c0_i32 = arith.constant 0 : i32
    %c0_i32_0 = arith.constant 0 : i32
    return %arg0, %c0_i32 : i32, i32
  }
}

</mosaic_0001>

<llo_original>
// kernel: tpu_custom_call.1
$region0: #{tpu_custom_call.1}
  #allocation0 [shape = 'u32[]', space=smem, size = 0x4, offset = 0x4, fixed_abs, tag = 'smem constant byte address 0x4 - core index']
  #allocation1 [shape = 'u32[144,128]{1,0:T(1,128)}', space=vmem, size = 0x12000, scoped, tag = 'internal scratch']
  %s0 = inlined_call_operand.hbm [shape: f32[16,32], index: 0, kind: input, shape index: {}]
  %s1 = inlined_call_operand.hbm [shape: f32[32,128], index: 1, kind: input, shape index: {}]
  %s2 = inlined_call_operand.vmem [shape: f32[1,128], index: 2, kind: input, shape index: {}]
  %s3 = inlined_call_operand.hbm [shape: f32[8,256], index: 3, kind: output, shape index: {}]
  %s4 = sld [smem:[#allocation0]]
  $region34: #{tpu_custom_call.1} parent=0
    _
  %s6 = ssub.s32 1, %s4
  %s7 = scalar_select 0, %s6, %s4
  $region1: #{tpu_custom_call.1} parent=0
    #allocation2 [shape = 'u8[8192]{0}', space=vmem, size = 0x2000, scoped, tag = 'input window, operand 0, single buffered']
    #allocation3 [shape = 's32[1]{0}', space=sflag, size = 0x4, scoped, tag = 'scoped memory for tpu_custom_call.1']
    #allocation4 [shape = 's32[1]{0}', space=sflag, size = 0x4, scoped, tag = 'scoped memory for tpu_custom_call.1']
    #allocation5 [shape = 'u8[16384]{0}', space=vmem, size = 0x4000, scoped, tag = 'input window, operand 1, single buffered']
    #allocation6 [shape = 's32[1]{0}', space=sflag, size = 0x4, scoped, tag = 'scoped memory for tpu_custom_call.1']
    #allocation7 [shape = 'u8[8192]{0}', space=vmem, size = 0x2000, scoped, tag = 'output window, operand 0, single buffered']
    %8 = vsyncpa [#allocation3], 0
    %9 = vsyncpa [#allocation6], 0
    %10 = vsyncpa [#allocation4], 0
    // Predicated region
    $region2: #{tpu_custom_call.1} parent=1 // pred_check
      _
    $region3: #{tpu_custom_call.1} parent=1 // pred_check_branch
      %12 = sbr.rel (0) target = $region5
    $region4: #{tpu_custom_call.1} parent=1 // pred_region
      %s13 = sadd.s32 0, 0
      %s14 = smul.u32 2, %s13
      %s16 = ssub.s32 256, 256
      %17 = vsyncadd [#allocation3], %s16
      %s18 = smul.addr %s14, 128
      %s19 = scalar_lea.hbm %s0, %s18
      %s20 = sshll.u32 [#allocation2], 4
      %s21 = int_to_ptr.vmem [resolvable:$true] %s20
      %26 = dma.hbm_to_vmem [thread:$0]  %s19, 256, %s21, [#allocation3], 128, 128, 8
    $region5: #{tpu_custom_call.1} parent=1 // pred_fallthru
      _
    // Predicated region
    $region6: #{tpu_custom_call.1} parent=1 // pred_check
      _
    $region7: #{tpu_custom_call.1} parent=1 // pred_check_branch
      %28 = sbr.rel (0) target = $region9
    $region8: #{tpu_custom_call.1} parent=1 // pred_region
      %s30 = ssub.s32 512, 512
      %31 = vsyncadd [#allocation6], %s30
      %s32 = sshll.u32 [#allocation5], 4
      %s33 = int_to_ptr.vmem [resolvable:$true] %s32
      %38 = dma.hbm_to_vmem [thread:$0]  %s1, 512, %s33, [#allocation6], 128, 128, 8
    $region9: #{tpu_custom_call.1} parent=1 // pred_fallthru
      _
    // Predicated region
    $region10: #{tpu_custom_call.1} parent=1 // pred_check
      _
    $region11: #{tpu_custom_call.1} parent=1 // pred_check_branch
      %40 = sbr.rel (0) target = $region13
    $region12: #{tpu_custom_call.1} parent=1 // pred_region
      _
    $region13: #{tpu_custom_call.1} parent=1 // pred_fallthru
      _
    // Predicated region
    $region14: #{tpu_custom_call.1} parent=1 // pred_check
      _
    $region15: #{tpu_custom_call.1} parent=1 // pred_check_branch
      %42 = sbr.rel (0) target = $region17
    $region16: #{tpu_custom_call.1} parent=1 // pred_region
      %43 = dma.done [#allocation3], 256
    $region17: #{tpu_custom_call.1} parent=1 // pred_fallthru
      _
    // Predicated region
    $region18: #{tpu_custom_call.1} parent=1 // pred_check
      _
    $region19: #{tpu_custom_call.1} parent=1 // pred_check_branch
      %45 = sbr.rel (0) target = $region21
    $region20: #{tpu_custom_call.1} parent=1 // pred_region
      %46 = dma.done [#allocation6], 512
    $region21: #{tpu_custom_call.1} parent=1 // pred_fallthru
      _
    %s47 = sadd.s32 0, 0
    %s48 = smul.u32 2, %s47
    %p49 = scmp.eq.s32.totalorder 0, 0
    // Predicated region
    $region22: #{tpu_custom_call.1} parent=1 // pred_check
      %p50 = pneg %p49
    $region23: #{tpu_custom_call.1} parent=1 // pred_check_branch
      %52 = sbr.rel (%p50) target = $region25
    $region24: #{tpu_custom_call.1} parent=1 // pred_region
      %53 = vst [vmem:[#allocation7] sm:$0xff] 0.0
      %54 = vst [vmem:[#allocation7 + $0x8] sm:$0xff] 0.0
    $region25: #{tpu_custom_call.1} parent=1 // pred_fallthru
      _
    %v55 = vld [vmem:[#allocation2] sm:$0xff]
    %v56 = vld [vmem:[#allocation2 + $0x8] sm:$0xff]
    %v57 = vld [vmem:[#allocation5] sm:$0xff]
    %v58 = vld [vmem:[#allocation5 + $0x8] sm:$0xff]
    %v59 = vld [vmem:[#allocation5 + $0x10] sm:$0xff]
    %v60 = vld [vmem:[#allocation5 + $0x18] sm:$0xff]
    %v61 = vld [vmem:[%s2] sm:$0x1]
    %v63 = vlaneseq
    %v64 = vshrl.u32 %v63, 7
    %v65 = vsub.s32 0, %v64
    %v66 = vrot.slane %v61, %v65
    %vm68 = vcmask 261120
    %v70 = vsel %vm68, %v55, 0
    %v73 = vsel %vm68, %v56, 0
    %75 = vmatprep.subr.mxu0 0.0
    %76 = vmatpush1.msra.mxu0 %v57
    %77 = vmatprep.subr.mxu0 0.0
    %78 = vmatpush1.msra.mxu0 %v58
    %79 = vmatprep.subr.mxu0 0.0
    %80 = vmatpush1.msra.mxu0 %v59
    %81 = vmatprep.subr.mxu0 0.0
    %82 = vmatpush1.msra.mxu0 %v60
    %83 = vmatprep.subr.mxu0 0.0
    %84 = vmatpush1.msra.mxu0 0.0
    %85 = vmatprep.subr.mxu0 0.0
    %86 = vmatpush1.msra.mxu0 0.0
    %87 = vmatprep.subr.mxu0 0.0
    %88 = vmatpush1.msra.mxu0 0.0
    %89 = vmatprep.subr.mxu0 0.0
    %90 = vmatpush1.msra.mxu0 0.0
    %91 = vmatprep.subr.mxu0 0.0
    %92 = vmatpush1.msra.mxu0 0.0
    %93 = vmatprep.subr.mxu0 0.0
    %94 = vmatpush1.msra.mxu0 0.0
    %95 = vmatprep.subr.mxu0 0.0
    %96 = vmatpush1.msra.mxu0 0.0
    %97 = vmatprep.subr.mxu0 0.0
    %98 = vmatpush1.msra.mxu0 0.0
    %99 = vmatprep.subr.mxu0 0.0
    %100 = vmatpush1.msra.mxu0 0.0
    %101 = vmatprep.subr.mxu0 0.0
    %102 = vmatpush1.msra.mxu0 0.0
    %103 = vmatprep.subr.mxu0 0.0
    %104 = vmatpush1.msra.mxu0 0.0
    %105 = vmatprep.subr.mxu0 0.0
    %106 = vmatpush1.msra.mxu0 0.0
    %107 = vmatprep.subr.mxu0 0.0
    %108 = vmatpush1.msra.mxu0 0.0
    %109 = vmatprep.subr.mxu0 0.0
    %110 = vmatpush1.msra.mxu0 0.0
    %111 = vmatprep.subr.mxu0 0.0
    %112 = vmatpush1.msra.mxu0 0.0
    %113 = vmatprep.subr.mxu0 0.0
    %114 = vmatpush1.msra.mxu0 0.0
    %115 = vmatprep.subr.mxu0 0.0
    %116 = vmatpush1.msra.mxu0 0.0
    %117 = vmatprep.subr.mxu0 0.0
    %118 = vmatpush1.msra.mxu0 0.0
    %119 = vmatprep.subr.mxu0 0.0
    %120 = vmatpush1.msra.mxu0 0.0
    %121 = vmatprep.subr.mxu0 0.0
    %122 = vmatpush1.msra.mxu0 0.0
    %123 = vmatprep.subr.mxu0 0.0
    %124 = vmatpush1.msra.mxu0 0.0
    %125 = vmatprep.subr.mxu0 0.0
    %126 = vmatpush1.msra.mxu0 0.0
    %127 = vmatprep.subr.mxu0 0.0
    %128 = vmatpush1.msra.mxu0 0.0
    %129 = vmatprep.subr.mxu0 0.0
    %130 = vmatpush1.msra.mxu0 0.0
    %131 = vmatprep.subr.mxu0 0.0
    %132 = vmatpush1.msra.mxu0 0.0
    %133 = vmatprep.subr.mxu0 0.0
    %134 = vmatpush1.msra.mxu0 0.0
    %135 = vmatprep.subr.mxu0 0.0
    %136 = vmatpush1.msra.mxu0 0.0
    %137 = vmatprep.subr.mxu0 0.0
    %138 = vmatpush1.msra.mxu0 0.0
    %139 = vmatprep.mubr.f32.mxu0 0.0
    %140 = vmatmul.mubr.f32.gmra.mrb[0].mxu0 %v70
    %v141 = vpop.f32.mrb[0].mxu0
    %v142 = vadd.f32 %v66, %v141
    %v143 = vpop.f32.mrb[0].mxu0
    %144 = vmatprep.mubr.f32.mxu0 0.0
    %145 = vmatmul.mubr.f32.gmra.mrb[0].mxu0 %v73
    %v146 = vpop.f32.mrb[0].mxu0
    %v147 = vadd.f32 %v66, %v146
    %v148 = vpop.f32.mrb[0].mxu0
    %149 = vdwg.mxu0
    %v150 = vmax.f32 %v142, 0.0
    %v151 = vmax.f32 %v147, 0.0
    %s152 = sadd.s32 0, 0
    %s153 = smul.u32 %s152, 16
    %v154 = vlaneseq
    %v155 = vshrl.u32 %v154, 7
    %v156 = vadd.s32 %v155, 8
    %v157 = vstv %s153
    %v158 = vadd.s32 %v157, %v155
    %v159 = vadd.s32 %v157, %v156
    %vm160 = vcmp.lt.s32.totalorder %v158, 2
    %vm161 = vcmp.lt.s32.totalorder %v159, 2
    %v162 = vsel %vm160, 1, 0
    %v163 = vsel %vm161, 1, 0
    %v164 = vcvt.s32.f32 %v162
    %v165 = vcvt.s32.f32 %v163
    %v166 = vmul.f32 %v150, %v164
    %v167 = vmul.f32 %v151, %v165
    %v168 = vld [vmem:[#allocation7] ss:$0 sm:$0xff]
    %v169 = vadd.f32 %v166, %v167
    %v170 = vrot.slane %v169, 4
    %v171 = vadd.f32 %v169, %v170
    %v172 = vrot.slane %v171, 2
    %v173 = vadd.f32 %v171, %v172
    %v174 = vrot.slane %v173, 1
    %v175 = vadd.f32 %v173, %v174
    %v176 = vadd.f32 %v168, %v175
    %177 = vst [vmem:[#allocation7] sm:$0x1] %v176
    %v178 = vld [vmem:[#allocation7 + $0x8] ss:$0 sm:$0xff]
    %v179 = vmul.f32 %v166, %v166
    %v180 = vmul.f32 %v167, %v167
    %v181 = vadd.f32 %v179, %v180
    %v182 = vrot.slane %v181, 4
    %v183 = vadd.f32 %v181, %v182
    %v184 = vrot.slane %v183, 2
    %v185 = vadd.f32 %v183, %v184
    %v186 = vrot.slane %v185, 1
    %v187 = vadd.f32 %v185, %v186
    %v188 = vadd.f32 %v178, %v187
    %189 = vst [vmem:[#allocation7 + $0x8] sm:$0x1] %v188
    // Predicated region
    $region26: #{tpu_custom_call.1} parent=1 // pred_check
      _
    $region27: #{tpu_custom_call.1} parent=1 // pred_check_branch
      %191 = sbr.rel (0) target = $region29
    $region28: #{tpu_custom_call.1} parent=1 // pred_region
      %s193 = ssub.s32 256, 256
      %194 = vsyncadd [#allocation4], %s193
      %s196 = sshll.u32 [#allocation7], 4
      %s197 = int_to_ptr.vmem [resolvable:$true] %s196
      %199 = dma.vmem_to_hbm [thread:$0]  %s197, 256, %s3, [#allocation4]
    $region29: #{tpu_custom_call.1} parent=1 // pred_fallthru
      _
    // Predicated region
    $region30: #{tpu_custom_call.1} parent=1 // pred_check
      _
    $region31: #{tpu_custom_call.1} parent=1 // pred_check_branch
      %201 = sbr.rel (0) target = $region33
    $region32: #{tpu_custom_call.1} parent=1 // pred_region
      %202 = dma.done [#allocation4], 256
    $region33: #{tpu_custom_call.1} parent=1 // pred_fallthru
      _
    %203 = vsyncpa [#allocation3], 1
    %204 = vsyncpa [#allocation6], 1
    %205 = vsyncpa [#allocation4], 1

</llo_original>
